<compile_context>
chip_gen: v6e
topology: v6e:2x2x1
jax: 0.10.0
libtpu: 0.0.40
codegen_flags: <defaults>
</compile_context>

<pallas_src>
import functools

import jax
import jax.numpy as jnp
from jax.experimental import pallas as pl
from jax.experimental.pallas import tpu as pltpu

GATE_PAD = 128                      # per-gate lane block (vreg-aligned slices)
_HI = jax.lax.Precision.HIGHEST     # exact-f32 matmuls for pack-time folds / reference


def _full_spec(shape):
    zeros = (0,) * len(shape)
    return pl.BlockSpec(shape, lambda i: zeros)


# ---------------------------------------------------------------------------
# Fused kernel: (graph-folded) bidirectional GRU stack + fc.  One MXU dot per
# GRU layer + one for fc; everything stays in VMEM.
# ---------------------------------------------------------------------------
def _grin_kernel(*refs, num_layers):
    x_ref = refs[0]
    layer_refs = refs[1:1 + 3 * num_layers]
    fc_wt_ref, fc_b_ref, out_ref = refs[1 + 3 * num_layers:]

    h = x_ref[...]                                          # (B, I) f32
    for l in range(num_layers):                             # L is tiny: unrolled
        w_ref = layer_refs[3 * l]                           # (d_in, 3*GATE_PAD) bf16: [Wr|Wz|Wn]
        b0_ref = layer_refs[3 * l + 1]                      # (1, 3*GATE_PAD) f32 gate biases
        bhn_ref = layer_refs[3 * l + 2]                     # (1, GATE_PAD)   f32 b_hn

        # One fused gate dot per layer (both directions packed on output axis).
        g = jnp.dot(h.astype(jnp.bfloat16), w_ref[...],
                    preferred_element_type=jnp.float32) + b0_ref[...]
        r = jax.nn.sigmoid(g[:, 0:GATE_PAD])
        z = jax.nn.sigmoid(g[:, GATE_PAD:2 * GATE_PAD])
        n = jnp.tanh(g[:, 2 * GATE_PAD:3 * GATE_PAD] + r * bhn_ref[...])
        # h' = (1-z)*n + z*h0, with h0 == 0 (seq_len == 1).  Padded lanes stay 0.
        h = (1.0 - z) * n                                   # (B, GATE_PAD)

    out = jnp.dot(h.astype(jnp.bfloat16), fc_wt_ref[...],
                  preferred_element_type=jnp.float32) + fc_b_ref[...]
    out_ref[...] = out.astype(out_ref.dtype)


# ---------------------------------------------------------------------------
# One-time parameter packing: graph-stage fold, gate fusion, bias merging.
# All folds done in f32 with HIGHEST-precision matmuls; cast to bf16 once.
# ---------------------------------------------------------------------------
def pack_params(params, *, input_size, hidden_size, num_layers, num_nodes):
    F = input_size // num_nodes
    H = hidden_size
    H2 = 2 * H
    assert H2 <= GATE_PAD, "gate padding assumes 2*hidden_size <= 128"

    # Graph stage as a single flat affine map  y = x @ W_graph + b_graph.
    #   kron(I_N, gc_w.T) @ kron(adj.T, I_F) = kron(adj.T, gc_w.T)
    W_graph = jnp.kron(params["adj"].T, params["gc_w"].T)                 # (I, I) f32
    b_graph = (jnp.sum(params["adj"], axis=1)[:, None]
               * params["gc_b"][None, :]).reshape(1, input_size)          # (1, I) f32

    w_layers, b0_layers, bhn_layers = [], [], []
    for l in range(num_layers):
        d_in = input_size if l == 0 else GATE_PAD
        w_ih = params["w_ih"][l]          # (2, 3H, d_in_raw), torch gate order r|z|n
        b_ih = params["b_ih"][l]          # (2, 3H)
        b_hh = params["b_hh"][l]          # (2, 3H)

        w_blocks, b0_blocks = [], []
        for g in range(3):                # r, z, n ; fwd|bwd concat on output axis
            wg = jnp.concatenate([w_ih[0, g * H:(g + 1) * H, :].T,
                                  w_ih[1, g * H:(g + 1) * H, :].T], axis=1)   # (d_in_raw, 2H)
            bg = jnp.concatenate([b_ih[0, g * H:(g + 1) * H],
                                  b_ih[1, g * H:(g + 1) * H]])                # (2H,)
            if g < 2:                     # r, z: recurrent bias survives (h0 == 0)
                bg = bg + jnp.concatenate([b_hh[0, g * H:(g + 1) * H],
                                           b_hh[1, g * H:(g + 1) * H]])
            if l == 0:
                # Fold the (affine) graph stage into layer-0 gate weights/biases.
                bg = bg + jnp.matmul(b_graph, wg, precision=_HI)[0]
                wg = jnp.matmul(W_graph, wg, precision=_HI)
            # Zero-pad each gate block to (d_in, GATE_PAD) -> vreg-aligned slices.
            wg_pad = jnp.zeros((d_in, GATE_PAD), jnp.float32)
            wg_pad = wg_pad.at[:wg.shape[0], :H2].set(wg)
            b0_pad = jnp.zeros((GATE_PAD,), jnp.float32).at[:H2].set(bg)
            w_blocks.append(wg_pad)
            b0_blocks.append(b0_pad)

        b_hn = jnp.concatenate([b_hh[0, 2 * H:], b_hh[1, 2 * H:]])            # (2H,)
        bhn_pad = jnp.zeros((1, GATE_PAD), jnp.float32).at[0, :H2].set(b_hn)

        w_layers.append(jnp.concatenate(w_blocks, axis=1).astype(jnp.bfloat16))
        b0_layers.append(jnp.concatenate(b0_blocks).reshape(1, 3 * GATE_PAD)
                         .astype(jnp.float32))
        bhn_layers.append(bhn_pad)

    fc_wt = jnp.zeros((GATE_PAD, input_size), jnp.float32)
    fc_wt = fc_wt.at[:H2, :].set(params["fc_w"].T).astype(jnp.bfloat16)       # (GATE_PAD, I)
    fc_b = params["fc_b"].reshape(1, input_size).astype(jnp.float32)

    return {"w": w_layers, "b0": b0_layers, "bhn": bhn_layers,
            "fc_wt": fc_wt, "fc_b": fc_b}


# ---------------------------------------------------------------------------
# Forward = single pallas_call on pre-packed params.
# ---------------------------------------------------------------------------
def grin_forward(x, packed, *, num_layers):
    B, input_size = x.shape
    args = [x]
    for l in range(num_layers):
        args += [packed["w"][l], packed["b0"][l], packed["bhn"][l]]
    args += [packed["fc_wt"], packed["fc_b"]]

    kernel = functools.partial(_grin_kernel, num_layers=num_layers)
    return pl.pallas_call(
        kernel,
        out_shape=jax.ShapeDtypeStruct((B, input_size), jnp.float32),
        grid=(1,),
        in_specs=[_full_spec(a.shape) for a in args],
        out_specs=_full_spec((B, input_size)),
        compiler_params=pltpu.CompilerParams(
            dimension_semantics=("arbitrary",)),
    )(*args)


# ---------------------------------------------------------------------------
# Deterministic parameter init + exact-f32 pure-JAX reference of the PyTorch
# module's forward (graph conv -> adj aggregation -> bidi GRU (seq=1) -> fc).
# ---------------------------------------------------------------------------
def init_params(key, *, input_size, hidden_size, num_layers, num_nodes):
    F = input_size // num_nodes
    ks = iter(jax.random.split(key, 8 + 4 * num_layers))

    def nrm(shape, k):
        return 0.1 * jax.random.normal(k, shape, jnp.float32)

    adj = jax.random.uniform(next(ks), (num_nodes, num_nodes), jnp.float32)
    adj = adj / jnp.sum(adj, axis=1, keepdims=True)   # row-normalized adjacency
    params = {
        "adj": adj,
        "gc_w": nrm((F, F), next(ks)),
        "gc_b": nrm((F,), next(ks)),
        "fc_w": nrm((input_size, 2 * hidden_size), next(ks)),
        "fc_b": nrm((input_size,), next(ks)),
        "w_ih": [], "w_hh": [], "b_ih": [], "b_hh": [],
    }
    for l in range(num_layers):
        d_in = input_size if l == 0 else 2 * hidden_size
        params["w_ih"].append(nrm((2, 3 * hidden_size, d_in), next(ks)))
        params["w_hh"].append(nrm((2, 3 * hidden_size, hidden_size), next(ks)))
        params["b_ih"].append(nrm((2, 3 * hidden_size), next(ks)))
        params["b_hh"].append(nrm((2, 3 * hidden_size), next(ks)))
    return params


def grin_reference(x, params, *, num_nodes, hidden_size, num_layers):
    B, I = x.shape
    F = I // num_nodes
    H = hidden_size

    xr = x.reshape(B, num_nodes, F)
    xc = jnp.einsum("bnf,gf->bng", xr, params["gc_w"], precision=_HI) + params["gc_b"]
    xa = jnp.einsum("nm,bmf->bnf", params["adj"], xc, precision=_HI)
    layer_in = xa.reshape(B, I)

    def cell(x_in, h, w_ih, w_hh, b_ih, b_hh):
        gi = jnp.dot(x_in, w_ih.T, precision=_HI) + b_ih
        gh = jnp.dot(h, w_hh.T, precision=_HI) + b_hh
        r = jax.nn.sigmoid(gi[:, :H] + gh[:, :H])
        z = jax.nn.sigmoid(gi[:, H:2 * H] + gh[:, H:2 * H])
        n = jnp.tanh(gi[:, 2 * H:] + r * gh[:, 2 * H:])
        return (1.0 - z) * n + z * h

    for l in range(num_layers):
        h0 = jnp.zeros((B, H), jnp.float32)
        hf = cell(layer_in, h0, params["w_ih"][l][0], params["w_hh"][l][0],
                  params["b_ih"][l][0], params["b_hh"][l][0])
        hb = cell(layer_in, h0, params["w_ih"][l][1], params["w_hh"][l][1],
                  params["b_ih"][l][1], params["b_hh"][l][1])
        layer_in = jnp.concatenate([hf, hb], axis=-1)
    return jnp.dot(layer_in, params["fc_w"].T, precision=_HI) + params["fc_b"]


if __name__ == "__main__":
    B = 2
    num_nodes = 4
    node_feat = 32
    input_size = num_nodes * node_feat   # 128
    hidden_size = 32
    num_layers = 2

    key = jax.random.PRNGKey(0)
    kx, kp = jax.random.split(key)
    x = jax.random.normal(kx, (B, input_size), jnp.float32)
    params = init_params(kp, input_size=input_size, hidden_size=hidden_size,
                         num_layers=num_layers, num_nodes=num_nodes)

    # Pack (graph fold / kron / gate merge / bias fold) ONCE, outside forward.
    packed = pack_params(params, input_size=input_size, hidden_size=hidden_size,
                         num_layers=num_layers, num_nodes=num_nodes)
    packed = jax.tree_util.tree_map(jax.block_until_ready, packed)

    fwd = jax.jit(functools.partial(grin_forward, num_layers=num_layers))
    out = jax.block_until_ready(fwd(x, packed))

    ref = grin_reference(x, params, num_nodes=num_nodes,
                         hidden_size=hidden_size, num_layers=num_layers)
    assert out.shape == (B, input_size)
    max_diff = float(jnp.max(jnp.abs(out - ref)))
    # Kernel uses bf16 matmul operands (f32 accumulation) vs an exact-f32
    # reference; tolerance sized for bf16 operand rounding.
    assert jnp.allclose(out, ref, atol=1e-2, rtol=1e-2), \
        f"max abs diff = {max_diff}"
    print("KERNEL_OK")
</pallas_src>

<mosaic_0001>
module attributes {stable_mosaic.version = 11 : i64} {
  func.func @_grin_kernel(%arg0: i32, %arg1: memref<2x128xf32, #tpu.memory_space<vmem>>, %arg2: memref<128x384xbf16, #tpu.memory_space<vmem>>, %arg3: memref<1x384xf32, #tpu.memory_space<vmem>>, %arg4: memref<1x128xf32, #tpu.memory_space<vmem>>, %arg5: memref<128x384xbf16, #tpu.memory_space<vmem>>, %arg6: memref<1x384xf32, #tpu.memory_space<vmem>>, %arg7: memref<1x128xf32, #tpu.memory_space<vmem>>, %arg8: memref<128x128xbf16, #tpu.memory_space<vmem>>, %arg9: memref<1x128xf32, #tpu.memory_space<vmem>>, %arg10: memref<2x128xf32, #tpu.memory_space<vmem>>) attributes {dimension_semantics = [#tpu.dimension_semantics<arbitrary>], iteration_bounds = array<i64: 1>, scalar_prefetch = 0 : i64, scratch_operands = 0 : i64, tpu.core_type = #tpu.core_type<tc>, window_params = [{pipeline_mode = #tpu.pipeline_mode<synchronous>, transform_indices = @transform_0, window_bounds = array<i64: 2, 128>}, {pipeline_mode = #tpu.pipeline_mode<synchronous>, transform_indices = @transform_1, window_bounds = array<i64: 128, 384>}, {pipeline_mode = #tpu.pipeline_mode<synchronous>, transform_indices = @transform_2, window_bounds = array<i64: 1, 384>}, {pipeline_mode = #tpu.pipeline_mode<synchronous>, transform_indices = @transform_3, window_bounds = array<i64: 1, 128>}, {pipeline_mode = #tpu.pipeline_mode<synchronous>, transform_indices = @transform_4, window_bounds = array<i64: 128, 384>}, {pipeline_mode = #tpu.pipeline_mode<synchronous>, transform_indices = @transform_5, window_bounds = array<i64: 1, 384>}, {pipeline_mode = #tpu.pipeline_mode<synchronous>, transform_indices = @transform_6, window_bounds = array<i64: 1, 128>}, {pipeline_mode = #tpu.pipeline_mode<synchronous>, transform_indices = @transform_7, window_bounds = array<i64: 128, 128>}, {pipeline_mode = #tpu.pipeline_mode<synchronous>, transform_indices = @transform_8, window_bounds = array<i64: 1, 128>}, {pipeline_mode = #tpu.pipeline_mode<synchronous>, transform_indices = @transform_9, window_bounds = array<i64: 2, 128>}]} {
    %c0 = arith.constant 0 : index
    %c0_0 = arith.constant 0 : index
    %0 = vector.load %arg1[%c0, %c0_0] : memref<2x128xf32, #tpu.memory_space<vmem>>, vector<2x128xf32>
    %1 = arith.truncf %0 : vector<2x128xf32> to vector<2x128xbf16>
    %c0_1 = arith.constant 0 : index
    %c0_2 = arith.constant 0 : index
    %2 = vector.load %arg2[%c0_1, %c0_2] : memref<128x384xbf16, #tpu.memory_space<vmem>>, vector<128x384xbf16>
    %cst = arith.constant dense<0.000000e+00> : vector<2x384xf32>
    %3 = tpu.matmul %1, %2, %cst {dimension_numbers = #tpu.dot_dimension_numbers<[1], [0], [0], [1], [0, 0, 1, 1], [], []>} : vector<2x128xbf16>, vector<128x384xbf16>, vector<2x384xf32> -> vector<2x384xf32>
    %c0_3 = arith.constant 0 : index
    %c0_4 = arith.constant 0 : index
    %4 = vector.load %arg3[%c0_3, %c0_4] : memref<1x384xf32, #tpu.memory_space<vmem>>, vector<1x384xf32>
    %5 = vector.broadcast %4 : vector<1x384xf32> to vector<2x384xf32>
    %6 = arith.addf %3, %5 : vector<2x384xf32>
    %7 = vector.extract_strided_slice %6 {offsets = [0, 0], sizes = [2, 128], strides = [1, 1]} : vector<2x384xf32> to vector<2x128xf32>
    %8 = arith.negf %7 : vector<2x128xf32>
    %9 = math.exp %8 : vector<2x128xf32>
    %cst_5 = arith.constant 1.000000e+00 : f32
    %10 = vector.broadcast %cst_5 : f32 to vector<2x128xf32>
    %11 = arith.addf %10, %9 : vector<2x128xf32>
    %12 = arith.divf %10, %11 : vector<2x128xf32>
    %13 = vector.extract_strided_slice %6 {offsets = [0, 128], sizes = [2, 128], strides = [1, 1]} : vector<2x384xf32> to vector<2x128xf32>
    %14 = arith.negf %13 : vector<2x128xf32>
    %15 = math.exp %14 : vector<2x128xf32>
    %cst_6 = arith.constant 1.000000e+00 : f32
    %16 = vector.broadcast %cst_6 : f32 to vector<2x128xf32>
    %17 = arith.addf %16, %15 : vector<2x128xf32>
    %18 = arith.divf %16, %17 : vector<2x128xf32>
    %19 = vector.extract_strided_slice %6 {offsets = [0, 256], sizes = [2, 128], strides = [1, 1]} : vector<2x384xf32> to vector<2x128xf32>
    %c0_7 = arith.constant 0 : index
    %c0_8 = arith.constant 0 : index
    %20 = vector.load %arg4[%c0_7, %c0_8] : memref<1x128xf32, #tpu.memory_space<vmem>>, vector<1x128xf32>
    %21 = vector.broadcast %20 : vector<1x128xf32> to vector<2x128xf32>
    %22 = arith.mulf %12, %21 : vector<2x128xf32>
    %23 = arith.addf %19, %22 : vector<2x128xf32>
    %24 = math.tanh %23 : vector<2x128xf32>
    %cst_9 = arith.constant 1.000000e+00 : f32
    %25 = vector.broadcast %cst_9 : f32 to vector<2x128xf32>
    %26 = arith.subf %25, %18 : vector<2x128xf32>
    %27 = arith.mulf %26, %24 : vector<2x128xf32>
    %28 = arith.truncf %27 : vector<2x128xf32> to vector<2x128xbf16>
    %c0_10 = arith.constant 0 : index
    %c0_11 = arith.constant 0 : index
    %29 = vector.load %arg5[%c0_10, %c0_11] : memref<128x384xbf16, #tpu.memory_space<vmem>>, vector<128x384xbf16>
    %cst_12 = arith.constant dense<0.000000e+00> : vector<2x384xf32>
    %30 = tpu.matmul %28, %29, %cst_12 {dimension_numbers = #tpu.dot_dimension_numbers<[1], [0], [0], [1], [0, 0, 1, 1], [], []>} : vector<2x128xbf16>, vector<128x384xbf16>, vector<2x384xf32> -> vector<2x384xf32>
    %c0_13 = arith.constant 0 : index
    %c0_14 = arith.constant 0 : index
    %31 = vector.load %arg6[%c0_13, %c0_14] : memref<1x384xf32, #tpu.memory_space<vmem>>, vector<1x384xf32>
    %32 = vector.broadcast %31 : vector<1x384xf32> to vector<2x384xf32>
    %33 = arith.addf %30, %32 : vector<2x384xf32>
    %34 = vector.extract_strided_slice %33 {offsets = [0, 0], sizes = [2, 128], strides = [1, 1]} : vector<2x384xf32> to vector<2x128xf32>
    %35 = arith.negf %34 : vector<2x128xf32>
    %36 = math.exp %35 : vector<2x128xf32>
    %cst_15 = arith.constant 1.000000e+00 : f32
    %37 = vector.broadcast %cst_15 : f32 to vector<2x128xf32>
    %38 = arith.addf %37, %36 : vector<2x128xf32>
    %39 = arith.divf %37, %38 : vector<2x128xf32>
    %40 = vector.extract_strided_slice %33 {offsets = [0, 128], sizes = [2, 128], strides = [1, 1]} : vector<2x384xf32> to vector<2x128xf32>
    %41 = arith.negf %40 : vector<2x128xf32>
    %42 = math.exp %41 : vector<2x128xf32>
    %cst_16 = arith.constant 1.000000e+00 : f32
    %43 = vector.broadcast %cst_16 : f32 to vector<2x128xf32>
    %44 = arith.addf %43, %42 : vector<2x128xf32>
    %45 = arith.divf %43, %44 : vector<2x128xf32>
    %46 = vector.extract_strided_slice %33 {offsets = [0, 256], sizes = [2, 128], strides = [1, 1]} : vector<2x384xf32> to vector<2x128xf32>
    %c0_17 = arith.constant 0 : index
    %c0_18 = arith.constant 0 : index
    %47 = vector.load %arg7[%c0_17, %c0_18] : memref<1x128xf32, #tpu.memory_space<vmem>>, vector<1x128xf32>
    %48 = vector.broadcast %47 : vector<1x128xf32> to vector<2x128xf32>
    %49 = arith.mulf %39, %48 : vector<2x128xf32>
    %50 = arith.addf %46, %49 : vector<2x128xf32>
    %51 = math.tanh %50 : vector<2x128xf32>
    %cst_19 = arith.constant 1.000000e+00 : f32
    %52 = vector.broadcast %cst_19 : f32 to vector<2x128xf32>
    %53 = arith.subf %52, %45 : vector<2x128xf32>
    %54 = arith.mulf %53, %51 : vector<2x128xf32>
    %55 = arith.truncf %54 : vector<2x128xf32> to vector<2x128xbf16>
    %c0_20 = arith.constant 0 : index
    %c0_21 = arith.constant 0 : index
    %56 = vector.load %arg8[%c0_20, %c0_21] : memref<128x128xbf16, #tpu.memory_space<vmem>>, vector<128x128xbf16>
    %cst_22 = arith.constant dense<0.000000e+00> : vector<2x128xf32>
    %57 = tpu.matmul %55, %56, %cst_22 {dimension_numbers = #tpu.dot_dimension_numbers<[1], [0], [0], [1], [0, 0, 1, 1], [], []>} : vector<2x128xbf16>, vector<128x128xbf16>, vector<2x128xf32> -> vector<2x128xf32>
    %c0_23 = arith.constant 0 : index
    %c0_24 = arith.constant 0 : index
    %58 = vector.load %arg9[%c0_23, %c0_24] : memref<1x128xf32, #tpu.memory_space<vmem>>, vector<1x128xf32>
    %59 = vector.broadcast %58 : vector<1x128xf32> to vector<2x128xf32>
    %60 = arith.addf %57, %59 : vector<2x128xf32>
    %c0_25 = arith.constant 0 : index
    %c0_26 = arith.constant 0 : index
    %61 = vector.load %arg10[%c0_25, %c0_26] : memref<2x128xf32, #tpu.memory_space<vmem>>, vector<2x128xf32>
    tpu.vector_store %arg10[%c0_25, %c0_26], %60 {strides = array<i32>} : memref<2x128xf32, #tpu.memory_space<vmem>>, vector<2x128xf32>,
    return
  }
  func.func @transform_0(%arg0: i32) -> (i32, i32) {
    %c0_i32 = arith.constant 0 : i32
    %c0_i32_0 = arith.constant 0 : i32
    %c0_i32_1 = arith.constant 0 : i32
    return %c0_i32, %c0_i32_0 : i32, i32
  }
  func.func @transform_1(%arg0: i32) -> (i32, i32) {
    %c0_i32 = arith.constant 0 : i32
    %c0_i32_0 = arith.constant 0 : i32
    %c0_i32_1 = arith.constant 0 : i32
    return %c0_i32, %c0_i32_0 : i32, i32
  }
  func.func @transform_2(%arg0: i32) -> (i32, i32) {
    %c0_i32 = arith.constant 0 : i32
    %c0_i32_0 = arith.constant 0 : i32
    %c0_i32_1 = arith.constant 0 : i32
    return %c0_i32, %c0_i32_0 : i32, i32
  }
  func.func @transform_3(%arg0: i32) -> (i32, i32) {
    %c0_i32 = arith.constant 0 : i32
    %c0_i32_0 = arith.constant 0 : i32
    %c0_i32_1 = arith.constant 0 : i32
    return %c0_i32, %c0_i32_0 : i32, i32
  }
  func.func @transform_4(%arg0: i32) -> (i32, i32) {
    %c0_i32 = arith.constant 0 : i32
    %c0_i32_0 = arith.constant 0 : i32
    %c0_i32_1 = arith.constant 0 : i32
    return %c0_i32, %c0_i32_0 : i32, i32
  }
  func.func @transform_5(%arg0: i32) -> (i32, i32) {
    %c0_i32 = arith.constant 0 : i32
    %c0_i32_0 = arith.constant 0 : i32
    %c0_i32_1 = arith.constant 0 : i32
    return %c0_i32, %c0_i32_0 : i32, i32
  }
  func.func @transform_6(%arg0: i32) -> (i32, i32) {
    %c0_i32 = arith.constant 0 : i32
    %c0_i32_0 = arith.constant 0 : i32
    %c0_i32_1 = arith.constant 0 : i32
    return %c0_i32, %c0_i32_0 : i32, i32
  }
  func.func @transform_7(%arg0: i32) -> (i32, i32) {
    %c0_i32 = arith.constant 0 : i32
    %c0_i32_0 = arith.constant 0 : i32
    %c0_i32_1 = arith.constant 0 : i32
    return %c0_i32, %c0_i32_0 : i32, i32
  }
  func.func @transform_8(%arg0: i32) -> (i32, i32) {
    %c0_i32 = arith.constant 0 : i32
    %c0_i32_0 = arith.constant 0 : i32
    %c0_i32_1 = arith.constant 0 : i32
    return %c0_i32, %c0_i32_0 : i32, i32
  }
  func.func @transform_9(%arg0: i32) -> (i32, i32) {
    %c0_i32 = arith.constant 0 : i32
    %c0_i32_0 = arith.constant 0 : i32
    %c0_i32_1 = arith.constant 0 : i32
    return %c0_i32, %c0_i32_0 : i32, i32
  }
}

</mosaic_0001>

<llo_original>
// kernel: grin_forward.1
$region0: #{grin_forward.1}
  #allocation0 [shape = 'u32[]', space=smem, size = 0x4, offset = 0x4, fixed_abs, tag = 'smem constant byte address 0x4 - core index']
  #allocation1 [shape = 'u32[144,128]{1,0:T(1,128)}', space=vmem, size = 0x12000, scoped, tag = 'internal scratch']
  %s0 = inlined_call_operand.hbm [shape: f32[2,128], index: 0, kind: input, shape index: {}]
  %s1 = inlined_call_operand.hbm [shape: bf16[128,384], index: 1, kind: input, shape index: {}]
  %s2 = inlined_call_operand.hbm [shape: f32[1,384], index: 2, kind: input, shape index: {}]
  %s3 = inlined_call_operand.vmem [shape: f32[1,128], index: 3, kind: input, shape index: {}]
  %s4 = inlined_call_operand.hbm [shape: bf16[128,384], index: 4, kind: input, shape index: {}]
  %s5 = inlined_call_operand.vmem [shape: f32[1,384], index: 5, kind: input, shape index: {}]
  %s6 = inlined_call_operand.vmem [shape: f32[1,128], index: 6, kind: input, shape index: {}]
  %s7 = inlined_call_operand.hbm [shape: bf16[128,128], index: 7, kind: input, shape index: {}]
  %s8 = inlined_call_operand.vmem [shape: f32[1,128], index: 8, kind: input, shape index: {}]
  %s9 = inlined_call_operand.hbm [shape: f32[2,128], index: 9, kind: output, shape index: {}]
  %s10 = sld [smem:[#allocation0]]
  $region66: #{grin_forward.1} parent=0
    _
  %s12 = ssub.s32 1, %s10
  %s13 = scalar_select 0, %s12, %s10
  $region1: #{grin_forward.1} parent=0
    #allocation2 [shape = 'u8[1024]{0}', space=vmem, size = 0x400, scoped, tag = 'input window, operand 0, single buffered']
    #allocation3 [shape = 's32[1]{0}', space=sflag, size = 0x4, scoped, tag = 'scoped memory for grin_forward.1']
    #allocation4 [shape = 's32[1]{0}', space=sflag, size = 0x4, scoped, tag = 'scoped memory for grin_forward.1']
    #allocation5 [shape = 'u8[98304]{0}', space=vmem, size = 0x18000, scoped, tag = 'input window, operand 1, single buffered']
    #allocation6 [shape = 's32[1]{0}', space=sflag, size = 0x4, scoped, tag = 'scoped memory for grin_forward.1']
    #allocation7 [shape = 'u8[1536]{0}', space=vmem, size = 0x800, scoped, tag = 'input window, operand 2, single buffered']
    #allocation8 [shape = 'u8[98304]{0}', space=vmem, size = 0x18000, scoped, tag = 'input window, operand 4, single buffered']
    #allocation9 [shape = 's32[1]{0}', space=sflag, size = 0x4, scoped, tag = 'scoped memory for grin_forward.1']
    #allocation10 [shape = 'u8[32768]{0}', space=vmem, size = 0x8000, scoped, tag = 'input window, operand 7, single buffered']
    #allocation11 [shape = 'u8[1024]{0}', space=vmem, size = 0x400, scoped, tag = 'output window, operand 0, single buffered']
    %14 = vsyncpa [#allocation3], 0
    %15 = vsyncpa [#allocation6], 0
    %16 = vsyncpa [#allocation9], 0
    %17 = vsyncpa [#allocation4], 0
    // Predicated region
    $region2: #{grin_forward.1} parent=1 // pred_check
      _
    $region3: #{grin_forward.1} parent=1 // pred_check_branch
      %19 = sbr.rel (0) target = $region5
    $region4: #{grin_forward.1} parent=1 // pred_region
      %s21 = ssub.s32 32, 32
      %22 = vsyncadd [#allocation3], %s21
      %s24 = sshll.u32 [#allocation2], 4
      %s25 = int_to_ptr.vmem [resolvable:$true] %s24
      %27 = dma.hbm_to_vmem [thread:$0]  %s0, 32, %s25, [#allocation3]
    $region5: #{grin_forward.1} parent=1 // pred_fallthru
      _
    // Predicated region
    $region6: #{grin_forward.1} parent=1 // pred_check
      _
    $region7: #{grin_forward.1} parent=1 // pred_check_branch
      %29 = sbr.rel (0) target = $region9
    $region8: #{grin_forward.1} parent=1 // pred_region
      %s31 = ssub.s32 3072, 3072
      %32 = vsyncadd [#allocation6], %s31
      %s33 = sshll.u32 [#allocation5], 4
      %s34 = int_to_ptr.vmem [resolvable:$true] %s33
      %39 = dma.hbm_to_vmem [thread:$0]  %s1, 3072, %s34, [#allocation6], 192, 192, 12
    $region9: #{grin_forward.1} parent=1 // pred_fallthru
      _
    // Predicated region
    $region10: #{grin_forward.1} parent=1 // pred_check
      _
    $region11: #{grin_forward.1} parent=1 // pred_check_branch
      %41 = sbr.rel (0) target = $region13
    $region12: #{grin_forward.1} parent=1 // pred_region
      %s43 = ssub.s32 48, 48
      %44 = vsyncadd [#allocation6], %s43
      %s46 = sshll.u32 [#allocation7], 4
      %s47 = int_to_ptr.vmem [resolvable:$true] %s46
      %49 = dma.hbm_to_vmem [thread:$0]  %s2, 48, %s47, [#allocation6]
    $region13: #{grin_forward.1} parent=1 // pred_fallthru
      _
    // Predicated region
    $region14: #{grin_forward.1} parent=1 // pred_check
      _
    $region15: #{grin_forward.1} parent=1 // pred_check_branch
      %51 = sbr.rel (0) target = $region17
    $region16: #{grin_forward.1} parent=1 // pred_region
      _
    $region17: #{grin_forward.1} parent=1 // pred_fallthru
      _
    // Predicated region
    $region18: #{grin_forward.1} parent=1 // pred_check
      _
    $region19: #{grin_forward.1} parent=1 // pred_check_branch
      %53 = sbr.rel (0) target = $region21
    $region20: #{grin_forward.1} parent=1 // pred_region
      %s55 = ssub.s32 3072, 3072
      %56 = vsyncadd [#allocation9], %s55
      %s57 = sshll.u32 [#allocation8], 4
      %s58 = int_to_ptr.vmem [resolvable:$true] %s57
      %63 = dma.hbm_to_vmem [thread:$0]  %s4, 3072, %s58, [#allocation9], 192, 192, 12
    $region21: #{grin_forward.1} parent=1 // pred_fallthru
      _
    // Predicated region
    $region22: #{grin_forward.1} parent=1 // pred_check
      _
    $region23: #{grin_forward.1} parent=1 // pred_check_branch
      %65 = sbr.rel (0) target = $region25
    $region24: #{grin_forward.1} parent=1 // pred_region
      _
    $region25: #{grin_forward.1} parent=1 // pred_fallthru
      _
    // Predicated region
    $region26: #{grin_forward.1} parent=1 // pred_check
      _
    $region27: #{grin_forward.1} parent=1 // pred_check_branch
      %67 = sbr.rel (0) target = $region29
    $region28: #{grin_forward.1} parent=1 // pred_region
      _
    $region29: #{grin_forward.1} parent=1 // pred_fallthru
      _
    // Predicated region
    $region30: #{grin_forward.1} parent=1 // pred_check
      _
    $region31: #{grin_forward.1} parent=1 // pred_check_branch
      %69 = sbr.rel (0) target = $region33
    $region32: #{grin_forward.1} parent=1 // pred_region
      %s71 = ssub.s32 1024, 1024
      %72 = vsyncadd [#allocation9], %s71
      %s73 = sshll.u32 [#allocation10], 4
      %s74 = int_to_ptr.vmem [resolvable:$true] %s73
      %79 = dma.hbm_to_vmem [thread:$0]  %s7, 1024, %s74, [#allocation9], 64, 64, 4
    $region33: #{grin_forward.1} parent=1 // pred_fallthru
      _
    // Predicated region
    $region34: #{grin_forward.1} parent=1 // pred_check
      _
    $region35: #{grin_forward.1} parent=1 // pred_check_branch
      %81 = sbr.rel (0) target = $region37
    $region36: #{grin_forward.1} parent=1 // pred_region
      _
    $region37: #{grin_forward.1} parent=1 // pred_fallthru
      _
    // Predicated region
    $region38: #{grin_forward.1} parent=1 // pred_check
      _
    $region39: #{grin_forward.1} parent=1 // pred_check_branch
      %83 = sbr.rel (0) target = $region41
    $region40: #{grin_forward.1} parent=1 // pred_region
      %84 = dma.done [#allocation3], 32
    $region41: #{grin_forward.1} parent=1 // pred_fallthru
      _
    // Predicated region
    $region42: #{grin_forward.1} parent=1 // pred_check
      _
    $region43: #{grin_forward.1} parent=1 // pred_check_branch
      %86 = sbr.rel (0) target = $region45
    $region44: #{grin_forward.1} parent=1 // pred_region
      %87 = dma.done [#allocation6], 3072
    $region45: #{grin_forward.1} parent=1 // pred_fallthru
      _
    // Predicated region
    $region46: #{grin_forward.1} parent=1 // pred_check
      _
    $region47: #{grin_forward.1} parent=1 // pred_check_branch
      %89 = sbr.rel (0) target = $region49
    $region48: #{grin_forward.1} parent=1 // pred_region
      %90 = dma.done [#allocation6], 48
    $region49: #{grin_forward.1} parent=1 // pred_fallthru
      _
    // Predicated region
    $region50: #{grin_forward.1} parent=1 // pred_check
      _
    $region51: #{grin_forward.1} parent=1 // pred_check_branch
      %92 = sbr.rel (0) target = $region53
    $region52: #{grin_forward.1} parent=1 // pred_region
      %93 = dma.done [#allocation9], 3072
    $region53: #{grin_forward.1} parent=1 // pred_fallthru
      _
    // Predicated region
    $region54: #{grin_forward.1} parent=1 // pred_check
      _
    $region55: #{grin_forward.1} parent=1 // pred_check_branch
      %95 = sbr.rel (0) target = $region57
    $region56: #{grin_forward.1} parent=1 // pred_region
      %96 = dma.done [#allocation9], 1024
    $region57: #{grin_forward.1} parent=1 // pred_fallthru
      _
    %v98 = vld [vmem:[#allocation2] sm:$0x3]
    %v99 = vpack.c.bf16 %v98, %v98
    %v100 = vld [vmem:[#allocation5] sm:$0xff]
    %v101 = vld [vmem:[#allocation5 + $0x8] sm:$0xf]
    %v102 = vld [vmem:[#allocation5 + $0xc] sm:$0xff]
    %v103 = vld [vmem:[#allocation5 + $0x14] sm:$0xf]
    %v104 = vld [vmem:[#allocation5 + $0x18] sm:$0xff]
    %v105 = vld [vmem:[#allocation5 + $0x20] sm:$0xf]
    %v106 = vld [vmem:[#allocation5 + $0x24] sm:$0xff]
    %v107 = vld [vmem:[#allocation5 + $0x2c] sm:$0xf]
    %v108 = vld [vmem:[#allocation5 + $0x30] sm:$0xff]
    %v109 = vld [vmem:[#allocation5 + $0x38] sm:$0xf]
    %v110 = vld [vmem:[#allocation5 + $0x3c] sm:$0xff]
    %v111 = vld [vmem:[#allocation5 + $0x44] sm:$0xf]
    %v112 = vld [vmem:[#allocation5 + $0x48] sm:$0xff]
    %v113 = vld [vmem:[#allocation5 + $0x50] sm:$0xf]
    %v114 = vld [vmem:[#allocation5 + $0x54] sm:$0xff]
    %v115 = vld [vmem:[#allocation5 + $0x5c] sm:$0xf]
    %v116 = vld [vmem:[#allocation5 + $0x60] sm:$0xff]
    %v117 = vld [vmem:[#allocation5 + $0x68] sm:$0xf]
    %v118 = vld [vmem:[#allocation5 + $0x6c] sm:$0xff]
    %v119 = vld [vmem:[#allocation5 + $0x74] sm:$0xf]
    %v120 = vld [vmem:[#allocation5 + $0x78] sm:$0xff]
    %v121 = vld [vmem:[#allocation5 + $0x80] sm:$0xf]
    %v122 = vld [vmem:[#allocation5 + $0x84] sm:$0xff]
    %v123 = vld [vmem:[#allocation5 + $0x8c] sm:$0xf]
    %v124 = vld [vmem:[#allocation5 + $0x90] sm:$0xff]
    %v125 = vld [vmem:[#allocation5 + $0x98] sm:$0xf]
    %v126 = vld [vmem:[#allocation5 + $0x9c] sm:$0xff]
    %v127 = vld [vmem:[#allocation5 + $0xa4] sm:$0xf]
    %v128 = vld [vmem:[#allocation5 + $0xa8] sm:$0xff]
    %v129 = vld [vmem:[#allocation5 + $0xb0] sm:$0xf]
    %v130 = vld [vmem:[#allocation5 + $0xb4] sm:$0xff]
    %v131 = vld [vmem:[#allocation5 + $0xbc] sm:$0xf]
    %v132 = vld [vmem:[#allocation7] sm:$0x7]
    %v134 = vlaneseq
    %v135 = vshrl.u32 %v134, 7
    %v136 = vsub.s32 0, %v135
    %v137 = vrot.slane %v132, %v136
    %v138 = vlaneseq
    %v139 = vshrl.u32 %v138, 7
    %v140 = vsub.s32 1, %v139
    %v141 = vrot.slane %v132, %v140
    %v142 = vlaneseq
    %v143 = vshrl.u32 %v142, 7
    %v144 = vsub.s32 2, %v143
    %v145 = vrot.slane %v132, %v144
    %v181 = vunpack.c.l.b16 %v100
    %v182 = vunpack.c.h.b16 %v100
    %v183 = vunpack.c.l.b16 %v101
    %v184 = vunpack.c.l.b16 %v102
    %v185 = vunpack.c.h.b16 %v102
    %v186 = vunpack.c.l.b16 %v103
    %v187 = vunpack.c.l.b16 %v104
    %v188 = vunpack.c.h.b16 %v104
    %v189 = vunpack.c.l.b16 %v105
    %v190 = vunpack.c.l.b16 %v106
    %v191 = vunpack.c.h.b16 %v106
    %v192 = vunpack.c.l.b16 %v107
    %v193 = vunpack.c.l.b16 %v108
    %v194 = vunpack.c.h.b16 %v108
    %v195 = vunpack.c.l.b16 %v109
    %v196 = vunpack.c.l.b16 %v110
    %v197 = vunpack.c.h.b16 %v110
    %v198 = vunpack.c.l.b16 %v111
    %v199 = vunpack.c.l.b16 %v112
    %v200 = vunpack.c.h.b16 %v112
    %v201 = vunpack.c.l.b16 %v113
    %v202 = vunpack.c.l.b16 %v114
    %v203 = vunpack.c.h.b16 %v114
    %v204 = vunpack.c.l.b16 %v115
    %v205 = vunpack.c.l.b16 %v116
    %v206 = vunpack.c.h.b16 %v116
    %v207 = vunpack.c.l.b16 %v117
    %v208 = vunpack.c.l.b16 %v118
    %v209 = vunpack.c.h.b16 %v118
    %v210 = vunpack.c.l.b16 %v119
    %v211 = vunpack.c.l.b16 %v120
    %v212 = vunpack.c.h.b16 %v120
    %v213 = vunpack.c.l.b16 %v121
    %v214 = vunpack.c.l.b16 %v122
    %v215 = vunpack.c.h.b16 %v122
    %v216 = vunpack.c.l.b16 %v123
    %v217 = vunpack.c.l.b16 %v124
    %v218 = vunpack.c.h.b16 %v124
    %v219 = vunpack.c.l.b16 %v125
    %v220 = vunpack.c.l.b16 %v126
    %v221 = vunpack.c.h.b16 %v126
    %v222 = vunpack.c.l.b16 %v127
    %v223 = vunpack.c.l.b16 %v128
    %v224 = vunpack.c.h.b16 %v128
    %v225 = vunpack.c.l.b16 %v129
    %v226 = vunpack.c.l.b16 %v130
    %v227 = vunpack.c.h.b16 %v130
    %v228 = vunpack.c.l.b16 %v131
    %v229 = vpack.c.b16 %v184, %v181
    %v230 = vpack.c.b16 %v185, %v182
    %v231 = vpack.c.b16 %v186, %v183
    %v232 = vpack.c.b16 %v190, %v187
    %v233 = vpack.c.b16 %v191, %v188
    %v234 = vpack.c.b16 %v192, %v189
    %v235 = vpack.c.b16 %v196, %v193
    %v236 = vpack.c.b16 %v197, %v194
    %v237 = vpack.c.b16 %v198, %v195
    %v238 = vpack.c.b16 %v202, %v199
    %v239 = vpack.c.b16 %v203, %v200
    %v240 = vpack.c.b16 %v204, %v201
    %v241 = vpack.c.b16 %v208, %v205
    %v242 = vpack.c.b16 %v209, %v206
    %v243 = vpack.c.b16 %v210, %v207
    %v244 = vpack.c.b16 %v214, %v211
    %v245 = vpack.c.b16 %v215, %v212
    %v246 = vpack.c.b16 %v216, %v213
    %v247 = vpack.c.b16 %v220, %v217
    %v248 = vpack.c.b16 %v221, %v218
    %v249 = vpack.c.b16 %v222, %v219
    %v250 = vpack.c.b16 %v226, %v223
    %v251 = vpack.c.b16 %v227, %v224
    %v252 = vpack.c.b16 %v228, %v225
    %277 = vmatprep.subr.bf16.mxu0 %v251
    %278 = vmatpush1.bf16.msra.mxu0 %v250
    %279 = vmatprep.subr.bf16.mxu0 %v248
    %280 = vmatpush1.bf16.msra.mxu0 %v247
    %281 = vmatprep.subr.bf16.mxu0 %v245
    %282 = vmatpush1.bf16.msra.mxu0 %v244
    %283 = vmatprep.subr.bf16.mxu0 %v242
    %284 = vmatpush1.bf16.msra.mxu0 %v241
    %285 = vmatprep.subr.bf16.mxu0 %v239
    %286 = vmatpush1.bf16.msra.mxu0 %v238
    %287 = vmatprep.subr.bf16.mxu0 %v236
    %288 = vmatpush1.bf16.msra.mxu0 %v235
    %289 = vmatprep.subr.bf16.mxu0 %v233
    %290 = vmatpush1.bf16.msra.mxu0 %v232
    %291 = vmatprep.subr.bf16.mxu0 %v230
    %292 = vmatpush1.bf16.msra.mxu0 %v229
    %293 = vmatprep.subr.bf16.mxu0 0
    %294 = vmatpush2.bf16.msra.mxu0 0
    %295 = vmatprep.subr.bf16.mxu0 0
    %296 = vmatpush2.bf16.msra.mxu0 0
    %297 = vmatprep.subr.bf16.mxu0 0
    %298 = vmatpush2.bf16.msra.mxu0 0
    %299 = vmatprep.subr.bf16.mxu0 0
    %300 = vmatpush2.bf16.msra.mxu0 0
    %301 = vmatprep.subr.bf16.mxu0 0
    %302 = vmatpush2.bf16.msra.mxu0 0
    %303 = vmatprep.subr.bf16.mxu0 0
    %304 = vmatpush2.bf16.msra.mxu0 0
    %305 = vmatprep.subr.bf16.mxu0 0
    %306 = vmatpush2.bf16.msra.mxu0 0
    %307 = vmatprep.subr.bf16.mxu0 0
    %308 = vmatpush2.bf16.msra.mxu0 0
    %309 = vmatprep.mubr.bf16.mxu0 0
    %310 = vmatmul.mubr.bf16.gmra.mxu0 %v99
    %v311 = vpop.f32.mrf.mxu0
    %v312 = vadd.f32 %v137, %v311
    %v313 = vpop.f32.mrf.mxu0
    %v314 = vadd.f32 %v141, %v313
    %v315 = vpop.f32.mrf.mxu0
    %v316 = vpop.f32.mrf.mxu0
    %317 = vdwg.mxu0
    %318 = vmatprep.subr.bf16.mxu0 0
    %319 = vmatpush1.bf16.msra.mxu0 %v252
    %320 = vmatprep.subr.bf16.mxu0 0
    %321 = vmatpush1.bf16.msra.mxu0 %v249
    %322 = vmatprep.subr.bf16.mxu0 0
    %323 = vmatpush1.bf16.msra.mxu0 %v246
    %324 = vmatprep.subr.bf16.mxu0 0
    %325 = vmatpush1.bf16.msra.mxu0 %v243
    %326 = vmatprep.subr.bf16.mxu0 0
    %327 = vmatpush1.bf16.msra.mxu0 %v240
    %328 = vmatprep.subr.bf16.mxu0 0
    %329 = vmatpush1.bf16.msra.mxu0 %v237
    %330 = vmatprep.subr.bf16.mxu0 0
    %331 = vmatpush1.bf16.msra.mxu0 %v234
    %332 = vmatprep.subr.bf16.mxu0 0
    %333 = vmatpush1.bf16.msra.mxu0 %v231
    %334 = vmatprep.subr.bf16.mxu0 0
    %335 = vmatpush2.bf16.msra.mxu0 0
    %336 = vmatprep.subr.bf16.mxu0 0
    %337 = vmatpush2.bf16.msra.mxu0 0
    %338 = vmatprep.subr.bf16.mxu0 0
    %339 = vmatpush2.bf16.msra.mxu0 0
    %340 = vmatprep.subr.bf16.mxu0 0
    %341 = vmatpush2.bf16.msra.mxu0 0
    %342 = vmatprep.subr.bf16.mxu0 0
    %343 = vmatpush2.bf16.msra.mxu0 0
    %344 = vmatprep.subr.bf16.mxu0 0
    %345 = vmatpush2.bf16.msra.mxu0 0
    %346 = vmatprep.subr.bf16.mxu0 0
    %347 = vmatpush2.bf16.msra.mxu0 0
    %348 = vmatprep.subr.bf16.mxu0 0
    %349 = vmatpush2.bf16.msra.mxu0 0
    %350 = vmatprep.mubr.bf16.mxu0 0
    %351 = vmatmul.mubr.bf16.gmra.mxu0 %v99
    %v352 = vpop.f32.mrf.mxu0
    %v353 = vadd.f32 %v145, %v352
    %v354 = vpop.f32.mrf.mxu0
    %v355 = vpop.f32.mrf.mxu0
    %v356 = vpop.f32.mrf.mxu0
    %357 = vdwg.mxu0
    %v358 = vxor.u32 %v312, 2147483648
    %v359 = vmul.f32 %v358, 1.442695
    %v360 = vpow.pop %v359
    %v361 = vadd.f32 %v360, 1.0
    %v362 = vrcp.pop %v361
    %v363 = vmul.f32 1.0, %v362
    %v364 = vxor.u32 %v314, 2147483648
    %v365 = vmul.f32 %v364, 1.442695
    %v366 = vpow.pop %v365
    %v367 = vadd.f32 %v366, 1.0
    %v368 = vrcp.pop %v367
    %v369 = vmul.f32 1.0, %v368
    %v370 = vld [vmem:[%s3] sm:$0x1]
    %v372 = vlaneseq
    %v373 = vshrl.u32 %v372, 7
    %v374 = vsub.s32 0, %v373
    %v375 = vrot.slane %v370, %v374
    %v377 = vmul.f32 %v363, %v375
    %v378 = vadd.f32 %v353, %v377
    %v379 = vtanh.pop %v378
    %v380 = vsub.f32 1.0, %v369
    %v381 = vmul.f32 %v380, %v379
    %v382 = vpack.c.bf16 %v381, %v381
    %v383 = vld [vmem:[#allocation8] sm:$0xff]
    %v384 = vld [vmem:[#allocation8 + $0x8] sm:$0xf]
    %v385 = vld [vmem:[#allocation8 + $0xc] sm:$0xff]
    %v386 = vld [vmem:[#allocation8 + $0x14] sm:$0xf]
    %v387 = vld [vmem:[#allocation8 + $0x18] sm:$0xff]
    %v388 = vld [vmem:[#allocation8 + $0x20] sm:$0xf]
    %v389 = vld [vmem:[#allocation8 + $0x24] sm:$0xff]
    %v390 = vld [vmem:[#allocation8 + $0x2c] sm:$0xf]
    %v391 = vld [vmem:[#allocation8 + $0x30] sm:$0xff]
    %v392 = vld [vmem:[#allocation8 + $0x38] sm:$0xf]
    %v393 = vld [vmem:[#allocation8 + $0x3c] sm:$0xff]
    %v394 = vld [vmem:[#allocation8 + $0x44] sm:$0xf]
    %v395 = vld [vmem:[#allocation8 + $0x48] sm:$0xff]
    %v396 = vld [vmem:[#allocation8 + $0x50] sm:$0xf]
    %v397 = vld [vmem:[#allocation8 + $0x54] sm:$0xff]
    %v398 = vld [vmem:[#allocation8 + $0x5c] sm:$0xf]
    %v399 = vld [vmem:[#allocation8 + $0x60] sm:$0xff]
    %v400 = vld [vmem:[#allocation8 + $0x68] sm:$0xf]
    %v401 = vld [vmem:[#allocation8 + $0x6c] sm:$0xff]
    %v402 = vld [vmem:[#allocation8 + $0x74] sm:$0xf]
    %v403 = vld [vmem:[#allocation8 + $0x78] sm:$0xff]
    %v404 = vld [vmem:[#allocation8 + $0x80] sm:$0xf]
    %v405 = vld [vmem:[#allocation8 + $0x84] sm:$0xff]
    %v406 = vld [vmem:[#allocation8 + $0x8c] sm:$0xf]
    %v407 = vld [vmem:[#allocation8 + $0x90] sm:$0xff]
    %v408 = vld [vmem:[#allocation8 + $0x98] sm:$0xf]
    %v409 = vld [vmem:[#allocation8 + $0x9c] sm:$0xff]
    %v410 = vld [vmem:[#allocation8 + $0xa4] sm:$0xf]
    %v411 = vld [vmem:[#allocation8 + $0xa8] sm:$0xff]
    %v412 = vld [vmem:[#allocation8 + $0xb0] sm:$0xf]
    %v413 = vld [vmem:[#allocation8 + $0xb4] sm:$0xff]
    %v414 = vld [vmem:[#allocation8 + $0xbc] sm:$0xf]
    %v415 = vld [vmem:[%s5] sm:$0x7]
    %v417 = vlaneseq
    %v418 = vshrl.u32 %v417, 7
    %v419 = vsub.s32 0, %v418
    %v420 = vrot.slane %v415, %v419
    %v421 = vlaneseq
    %v422 = vshrl.u32 %v421, 7
    %v423 = vsub.s32 1, %v422
    %v424 = vrot.slane %v415, %v423
    %v425 = vlaneseq
    %v426 = vshrl.u32 %v425, 7
    %v427 = vsub.s32 2, %v426
    %v428 = vrot.slane %v415, %v427
    %v464 = vunpack.c.l.b16 %v383
    %v465 = vunpack.c.h.b16 %v383
    %v466 = vunpack.c.l.b16 %v384
    %v467 = vunpack.c.l.b16 %v385
    %v468 = vunpack.c.h.b16 %v385
    %v469 = vunpack.c.l.b16 %v386
    %v470 = vunpack.c.l.b16 %v387
    %v471 = vunpack.c.h.b16 %v387
    %v472 = vunpack.c.l.b16 %v388
    %v473 = vunpack.c.l.b16 %v389
    %v474 = vunpack.c.h.b16 %v389
    %v475 = vunpack.c.l.b16 %v390
    %v476 = vunpack.c.l.b16 %v391
    %v477 = vunpack.c.h.b16 %v391
    %v478 = vunpack.c.l.b16 %v392
    %v479 = vunpack.c.l.b16 %v393
    %v480 = vunpack.c.h.b16 %v393
    %v481 = vunpack.c.l.b16 %v394
    %v482 = vunpack.c.l.b16 %v395
    %v483 = vunpack.c.h.b16 %v395
    %v484 = vunpack.c.l.b16 %v396
    %v485 = vunpack.c.l.b16 %v397
    %v486 = vunpack.c.h.b16 %v397
    %v487 = vunpack.c.l.b16 %v398
    %v488 = vunpack.c.l.b16 %v399
    %v489 = vunpack.c.h.b16 %v399
    %v490 = vunpack.c.l.b16 %v400
    %v491 = vunpack.c.l.b16 %v401
    %v492 = vunpack.c.h.b16 %v401
    %v493 = vunpack.c.l.b16 %v402
    %v494 = vunpack.c.l.b16 %v403
    %v495 = vunpack.c.h.b16 %v403
    %v496 = vunpack.c.l.b16 %v404
    %v497 = vunpack.c.l.b16 %v405
    %v498 = vunpack.c.h.b16 %v405
    %v499 = vunpack.c.l.b16 %v406
    %v500 = vunpack.c.l.b16 %v407
    %v501 = vunpack.c.h.b16 %v407
    %v502 = vunpack.c.l.b16 %v408
    %v503 = vunpack.c.l.b16 %v409
    %v504 = vunpack.c.h.b16 %v409
    %v505 = vunpack.c.l.b16 %v410
    %v506 = vunpack.c.l.b16 %v411
    %v507 = vunpack.c.h.b16 %v411
    %v508 = vunpack.c.l.b16 %v412
    %v509 = vunpack.c.l.b16 %v413
    %v510 = vunpack.c.h.b16 %v413
    %v511 = vunpack.c.l.b16 %v414
    %v512 = vpack.c.b16 %v467, %v464
    %v513 = vpack.c.b16 %v468, %v465
    %v514 = vpack.c.b16 %v469, %v466
    %v515 = vpack.c.b16 %v473, %v470
    %v516 = vpack.c.b16 %v474, %v471
    %v517 = vpack.c.b16 %v475, %v472
    %v518 = vpack.c.b16 %v479, %v476
    %v519 = vpack.c.b16 %v480, %v477
    %v520 = vpack.c.b16 %v481, %v478
    %v521 = vpack.c.b16 %v485, %v482
    %v522 = vpack.c.b16 %v486, %v483
    %v523 = vpack.c.b16 %v487, %v484
    %v524 = vpack.c.b16 %v491, %v488
    %v525 = vpack.c.b16 %v492, %v489
    %v526 = vpack.c.b16 %v493, %v490
    %v527 = vpack.c.b16 %v497, %v494
    %v528 = vpack.c.b16 %v498, %v495
    %v529 = vpack.c.b16 %v499, %v496
    %v530 = vpack.c.b16 %v503, %v500
    %v531 = vpack.c.b16 %v504, %v501
    %v532 = vpack.c.b16 %v505, %v502
    %v533 = vpack.c.b16 %v509, %v506
    %v534 = vpack.c.b16 %v510, %v507
    %v535 = vpack.c.b16 %v511, %v508
    %560 = vmatprep.subr.bf16.mxu0 %v534
    %561 = vmatpush1.bf16.msra.mxu0 %v533
    %562 = vmatprep.subr.bf16.mxu0 %v531
    %563 = vmatpush1.bf16.msra.mxu0 %v530
    %564 = vmatprep.subr.bf16.mxu0 %v528
    %565 = vmatpush1.bf16.msra.mxu0 %v527
    %566 = vmatprep.subr.bf16.mxu0 %v525
    %567 = vmatpush1.bf16.msra.mxu0 %v524
    %568 = vmatprep.subr.bf16.mxu0 %v522
    %569 = vmatpush1.bf16.msra.mxu0 %v521
    %570 = vmatprep.subr.bf16.mxu0 %v519
    %571 = vmatpush1.bf16.msra.mxu0 %v518
    %572 = vmatprep.subr.bf16.mxu0 %v516
    %573 = vmatpush1.bf16.msra.mxu0 %v515
    %574 = vmatprep.subr.bf16.mxu0 %v513
    %575 = vmatpush1.bf16.msra.mxu0 %v512
    %576 = vmatprep.subr.bf16.mxu0 0
    %577 = vmatpush2.bf16.msra.mxu0 0
    %578 = vmatprep.subr.bf16.mxu0 0
    %579 = vmatpush2.bf16.msra.mxu0 0
    %580 = vmatprep.subr.bf16.mxu0 0
    %581 = vmatpush2.bf16.msra.mxu0 0
    %582 = vmatprep.subr.bf16.mxu0 0
    %583 = vmatpush2.bf16.msra.mxu0 0
    %584 = vmatprep.subr.bf16.mxu0 0
    %585 = vmatpush2.bf16.msra.mxu0 0
    %586 = vmatprep.subr.bf16.mxu0 0
    %587 = vmatpush2.bf16.msra.mxu0 0
    %588 = vmatprep.subr.bf16.mxu0 0
    %589 = vmatpush2.bf16.msra.mxu0 0
    %590 = vmatprep.subr.bf16.mxu0 0
    %591 = vmatpush2.bf16.msra.mxu0 0
    %592 = vmatprep.mubr.bf16.mxu0 0
    %593 = vmatmul.mubr.bf16.gmra.mxu0 %v382
    %v594 = vpop.f32.mrf.mxu0
    %v595 = vadd.f32 %v420, %v594
    %v596 = vpop.f32.mrf.mxu0
    %v597 = vadd.f32 %v424, %v596
    %v598 = vpop.f32.mrf.mxu0
    %v599 = vpop.f32.mrf.mxu0
    %600 = vdwg.mxu0
    %601 = vmatprep.subr.bf16.mxu0 0
    %602 = vmatpush1.bf16.msra.mxu0 %v535
    %603 = vmatprep.subr.bf16.mxu0 0
    %604 = vmatpush1.bf16.msra.mxu0 %v532
    %605 = vmatprep.subr.bf16.mxu0 0
    %606 = vmatpush1.bf16.msra.mxu0 %v529
    %607 = vmatprep.subr.bf16.mxu0 0
    %608 = vmatpush1.bf16.msra.mxu0 %v526
    %609 = vmatprep.subr.bf16.mxu0 0
    %610 = vmatpush1.bf16.msra.mxu0 %v523
    %611 = vmatprep.subr.bf16.mxu0 0
    %612 = vmatpush1.bf16.msra.mxu0 %v520
    %613 = vmatprep.subr.bf16.mxu0 0
    %614 = vmatpush1.bf16.msra.mxu0 %v517
    %615 = vmatprep.subr.bf16.mxu0 0
    %616 = vmatpush1.bf16.msra.mxu0 %v514
    %617 = vmatprep.subr.bf16.mxu0 0
    %618 = vmatpush2.bf16.msra.mxu0 0
    %619 = vmatprep.subr.bf16.mxu0 0
    %620 = vmatpush2.bf16.msra.mxu0 0
    %621 = vmatprep.subr.bf16.mxu0 0
    %622 = vmatpush2.bf16.msra.mxu0 0
    %623 = vmatprep.subr.bf16.mxu0 0
    %624 = vmatpush2.bf16.msra.mxu0 0
    %625 = vmatprep.subr.bf16.mxu0 0
    %626 = vmatpush2.bf16.msra.mxu0 0
    %627 = vmatprep.subr.bf16.mxu0 0
    %628 = vmatpush2.bf16.msra.mxu0 0
    %629 = vmatprep.subr.bf16.mxu0 0
    %630 = vmatpush2.bf16.msra.mxu0 0
    %631 = vmatprep.subr.bf16.mxu0 0
    %632 = vmatpush2.bf16.msra.mxu0 0
    %633 = vmatprep.mubr.bf16.mxu0 0
    %634 = vmatmul.mubr.bf16.gmra.mxu0 %v382
    %v635 = vpop.f32.mrf.mxu0
    %v636 = vadd.f32 %v428, %v635
    %v637 = vpop.f32.mrf.mxu0
    %v638 = vpop.f32.mrf.mxu0
    %v639 = vpop.f32.mrf.mxu0
    %640 = vdwg.mxu0
    %v641 = vxor.u32 %v595, 2147483648
    %v642 = vmul.f32 %v641, 1.442695
    %v643 = vpow.pop %v642
    %v644 = vadd.f32 %v643, 1.0
    %v645 = vrcp.pop %v644
    %v646 = vmul.f32 1.0, %v645
    %v647 = vxor.u32 %v597, 2147483648
    %v648 = vmul.f32 %v647, 1.442695
    %v649 = vpow.pop %v648
    %v650 = vadd.f32 %v649, 1.0
    %v651 = vrcp.pop %v650
    %v652 = vmul.f32 1.0, %v651
    %v653 = vld [vmem:[%s6] sm:$0x1]
    %v655 = vlaneseq
    %v656 = vshrl.u32 %v655, 7
    %v657 = vsub.s32 0, %v656
    %v658 = vrot.slane %v653, %v657
    %v660 = vmul.f32 %v646, %v658
    %v661 = vadd.f32 %v636, %v660
    %v662 = vtanh.pop %v661
    %v663 = vsub.f32 1.0, %v652
    %v664 = vmul.f32 %v663, %v662
    %v665 = vpack.c.bf16 %v664, %v664
    %v666 = vld [vmem:[#allocation10] sm:$0xf]
    %v667 = vld [vmem:[#allocation10 + $0x4] sm:$0xf]
    %v668 = vld [vmem:[#allocation10 + $0x8] sm:$0xf]
    %v669 = vld [vmem:[#allocation10 + $0xc] sm:$0xf]
    %v670 = vld [vmem:[#allocation10 + $0x10] sm:$0xf]
    %v671 = vld [vmem:[#allocation10 + $0x14] sm:$0xf]
    %v672 = vld [vmem:[#allocation10 + $0x18] sm:$0xf]
    %v673 = vld [vmem:[#allocation10 + $0x1c] sm:$0xf]
    %v674 = vld [vmem:[#allocation10 + $0x20] sm:$0xf]
    %v675 = vld [vmem:[#allocation10 + $0x24] sm:$0xf]
    %v676 = vld [vmem:[#allocation10 + $0x28] sm:$0xf]
    %v677 = vld [vmem:[#allocation10 + $0x2c] sm:$0xf]
    %v678 = vld [vmem:[#allocation10 + $0x30] sm:$0xf]
    %v679 = vld [vmem:[#allocation10 + $0x34] sm:$0xf]
    %v680 = vld [vmem:[#allocation10 + $0x38] sm:$0xf]
    %v681 = vld [vmem:[#allocation10 + $0x3c] sm:$0xf]
    %v682 = vld [vmem:[%s8] sm:$0x1]
    %v684 = vlaneseq
    %v685 = vshrl.u32 %v684, 7
    %v686 = vsub.s32 0, %v685
    %v687 = vrot.slane %v682, %v686
    %v705 = vunpack.c.l.b16 %v666
    %v706 = vunpack.c.l.b16 %v667
    %v707 = vunpack.c.l.b16 %v668
    %v708 = vunpack.c.l.b16 %v669
    %v709 = vunpack.c.l.b16 %v670
    %v710 = vunpack.c.l.b16 %v671
    %v711 = vunpack.c.l.b16 %v672
    %v712 = vunpack.c.l.b16 %v673
    %v713 = vunpack.c.l.b16 %v674
    %v714 = vunpack.c.l.b16 %v675
    %v715 = vunpack.c.l.b16 %v676
    %v716 = vunpack.c.l.b16 %v677
    %v717 = vunpack.c.l.b16 %v678
    %v718 = vunpack.c.l.b16 %v679
    %v719 = vunpack.c.l.b16 %v680
    %v720 = vunpack.c.l.b16 %v681
    %v721 = vpack.c.b16 %v706, %v705
    %v722 = vpack.c.b16 %v708, %v707
    %v723 = vpack.c.b16 %v710, %v709
    %v724 = vpack.c.b16 %v712, %v711
    %v725 = vpack.c.b16 %v714, %v713
    %v726 = vpack.c.b16 %v716, %v715
    %v727 = vpack.c.b16 %v718, %v717
    %v728 = vpack.c.b16 %v720, %v719
    %737 = vmatprep.subr.bf16.mxu0 0
    %738 = vmatpush1.bf16.msra.mxu0 %v728
    %739 = vmatprep.subr.bf16.mxu0 0
    %740 = vmatpush1.bf16.msra.mxu0 %v727
    %741 = vmatprep.subr.bf16.mxu0 0
    %742 = vmatpush1.bf16.msra.mxu0 %v726
    %743 = vmatprep.subr.bf16.mxu0 0
    %744 = vmatpush1.bf16.msra.mxu0 %v725
    %745 = vmatprep.subr.bf16.mxu0 0
    %746 = vmatpush1.bf16.msra.mxu0 %v724
    %747 = vmatprep.subr.bf16.mxu0 0
    %748 = vmatpush1.bf16.msra.mxu0 %v723
    %749 = vmatprep.subr.bf16.mxu0 0
    %750 = vmatpush1.bf16.msra.mxu0 %v722
    %751 = vmatprep.subr.bf16.mxu0 0
    %752 = vmatpush1.bf16.msra.mxu0 %v721
    %753 = vmatprep.subr.bf16.mxu0 0
    %754 = vmatpush2.bf16.msra.mxu0 0
    %755 = vmatprep.subr.bf16.mxu0 0
    %756 = vmatpush2.bf16.msra.mxu0 0
    %757 = vmatprep.subr.bf16.mxu0 0
    %758 = vmatpush2.bf16.msra.mxu0 0
    %759 = vmatprep.subr.bf16.mxu0 0
    %760 = vmatpush2.bf16.msra.mxu0 0
    %761 = vmatprep.subr.bf16.mxu0 0
    %762 = vmatpush2.bf16.msra.mxu0 0
    %763 = vmatprep.subr.bf16.mxu0 0
    %764 = vmatpush2.bf16.msra.mxu0 0
    %765 = vmatprep.subr.bf16.mxu0 0
    %766 = vmatpush2.bf16.msra.mxu0 0
    %767 = vmatprep.subr.bf16.mxu0 0
    %768 = vmatpush2.bf16.msra.mxu0 0
    %769 = vmatprep.mubr.bf16.mxu0 0
    %770 = vmatmul.mubr.bf16.gmra.mxu0 %v665
    %v771 = vpop.f32.mrf.mxu0
    %v772 = vadd.f32 %v687, %v771
    %v773 = vpop.f32.mrf.mxu0
    %v774 = vpop.f32.mrf.mxu0
    %v775 = vpop.f32.mrf.mxu0
    %776 = vdwg.mxu0
    %777 = vst [vmem:[#allocation11] sm:$0x3] %v772
    // Predicated region
    $region58: #{grin_forward.1} parent=1 // pred_check
      _
    $region59: #{grin_forward.1} parent=1 // pred_check_branch
      %779 = sbr.rel (0) target = $region61
    $region60: #{grin_forward.1} parent=1 // pred_region
      %s781 = ssub.s32 32, 32
      %782 = vsyncadd [#allocation4], %s781
      %s784 = sshll.u32 [#allocation11], 4
      %s785 = int_to_ptr.vmem [resolvable:$true] %s784
      %787 = dma.vmem_to_hbm [thread:$0]  %s785, 32, %s9, [#allocation4]
    $region61: #{grin_forward.1} parent=1 // pred_fallthru
      _
    // Predicated region
    $region62: #{grin_forward.1} parent=1 // pred_check
      _
    $region63: #{grin_forward.1} parent=1 // pred_check_branch
      %789 = sbr.rel (0) target = $region65
    $region64: #{grin_forward.1} parent=1 // pred_region
      %790 = dma.done [#allocation4], 32
    $region65: #{grin_forward.1} parent=1 // pred_fallthru
      _
    %791 = vsyncpa [#allocation3], 1
    %792 = vsyncpa [#allocation6], 1
    %793 = vsyncpa [#allocation9], 1
    %794 = vsyncpa [#allocation4], 1

</llo_original>
